<compile_context>
chip_gen: v7x
topology: tpu7x:2x2x1
jax: 0.10.0
libtpu: 0.0.40
codegen_flags: <defaults>
</compile_context>

<pallas_src>
import jax
import jax.numpy as jnp
import numpy as np
from jax.experimental import pallas as pl
from jax.experimental.pallas import tpu as pltpu


def _round_up(x, m):
    return ((x + m - 1) // m) * m


def _mlp_kernel(x_ref, w_ref, b_ref, o_ref):
    """Single fused affine map: o = x @ W_eff + b_eff (f32 MXU accumulation)."""
    acc = jnp.dot(x_ref[...], w_ref[...], preferred_element_type=jnp.float32)
    o_ref[...] = (acc + b_ref[...]).astype(o_ref.dtype)


def prepare_params(weights, biases, *, compute_dtype=jnp.bfloat16):
    """One-time parameter prep: collapse the affine chain, pad, cast.

    weights[l]: (din, dout) pre-transposed; biases[l]: (dout,) or (1, dout).
    Returns (W_eff padded bf16, b_eff padded f32, in_dim, out_dim).
    """
    hi = jax.lax.Precision.HIGHEST
    w_eff = weights[0].astype(jnp.float32)
    b_eff = jnp.reshape(biases[0], (1, -1)).astype(jnp.float32)
    for w, b in zip(weights[1:], biases[1:]):
        w32 = w.astype(jnp.float32)
        b32 = jnp.reshape(b, (1, -1)).astype(jnp.float32)
        # Collapse in f32 so numerics match (or beat) the original layer chain.
        w_eff = jnp.matmul(w_eff, w32, precision=hi)
        b_eff = jnp.matmul(b_eff, w32, precision=hi) + b32

    din, dout = w_eff.shape
    din_p, dout_p = _round_up(din, 128), _round_up(dout, 128)
    # Zero-padded rows/columns keep the math exact while making every vreg
    # lane-dense and every store unmasked.
    w_p = jnp.zeros((din_p, dout_p), compute_dtype)
    w_p = w_p.at[:din, :dout].set(w_eff.astype(compute_dtype))
    b_p = jnp.zeros((1, dout_p), jnp.float32)
    b_p = b_p.at[:, :dout].set(b_eff)
    return w_p, b_p, din, dout


def _default_tm(B):
    """Batch tile: dense bf16 vregs, MXU-height-capped, megacore-friendly."""
    try:
        kind = jax.devices()[0].device_kind.lower()
    except Exception:  # pragma: no cover
        kind = ""
    mxu_rows = 128 if "v5" in kind else 256  # v5e MXUs are 128-wide
    if B >= 2 * mxu_rows:
        return mxu_rows
    if B >= 32:
        # >=2 grid steps so both of v7x's TensorCores get work; the ~0.35us
        # per-step overhead is negligible against these matmuls.
        return max(16, _round_up(-(-B // 2), 16))
    # Tiny batch: single grid step, rounded to a full bf16 sublane pack (16).
    return max(16, _round_up(B, 16))


def feedforward_nn(x, params, *, tm=None, out_dtype=jnp.bfloat16):
    """Fused forward pass. `params` comes from prepare_params()."""
    w_p, b_p, din, dout = params
    B, D = x.shape
    assert D == din, f"feature dim {D} != expected {din}"
    din_p, dout_p = w_p.shape

    if tm is None:
        tm = _default_tm(B)
    Bp = _round_up(B, tm)

    xc = x.astype(w_p.dtype)
    if Bp != B or din_p != D:
        # Only pay the padding copy for ragged shapes.
        xc = jnp.pad(xc, ((0, Bp - B), (0, din_p - D)))

    itemsize = lambda a: a.size * a.dtype.itemsize
    cost = pl.CostEstimate(
        flops=2 * Bp * din_p * dout_p,
        transcendentals=0,
        bytes_accessed=itemsize(xc) + itemsize(w_p) + itemsize(b_p)
        + Bp * dout_p * jnp.dtype(out_dtype).itemsize,
    )

    out_padded = pl.pallas_call(
        _mlp_kernel,
        out_shape=jax.ShapeDtypeStruct((Bp, dout_p), out_dtype),
        grid_spec=pltpu.PrefetchScalarGridSpec(
            num_scalar_prefetch=0,
            grid=(Bp // tm,),
            in_specs=[
                pl.BlockSpec((tm, din_p), lambda i: (i, 0)),
                # Constant index_maps -> weight/bias stay resident in VMEM.
                pl.BlockSpec((din_p, dout_p), lambda i: (0, 0)),
                pl.BlockSpec((1, dout_p), lambda i: (0, 0)),
            ],
            out_specs=pl.BlockSpec((tm, dout_p), lambda i: (i, 0)),
        ),
        compiler_params=pltpu.CompilerParams(
            dimension_semantics=("parallel",)),
        cost_estimate=cost,
    )(xc, w_p, b_p)

    return out_padded[:B, :dout]


if __name__ == "__main__":
    # Shapes implied by the module: input_size (flattened features),
    # hidden_sizes = [256, 128, 64, 32], num_classes (small).
    input_size = 512
    hidden_sizes = [256, 128, 64, 32]
    num_classes = 10
    batch = 16

    key = jax.random.PRNGKey(0)
    dims = [input_size] + hidden_sizes + [num_classes]

    weights, biases = [], []
    for din, dout in zip(dims[:-1], dims[1:]):
        key, kw, kb = jax.random.split(key, 3)
        bound = 1.0 / np.sqrt(din)  # matches PyTorch Linear default init range
        weights.append(jax.random.uniform(kw, (din, dout), jnp.float32, -bound, bound))
        biases.append(jax.random.uniform(kb, (1, dout), jnp.float32, -bound, bound))

    key, kx = jax.random.split(key)
    x = jax.random.uniform(kx, (batch, input_size), jnp.float32)

    # One-time parameter prep (collapse + pad + cast), reused across calls.
    params = prepare_params(weights, biases)
    params = jax.block_until_ready(params)

    out = feedforward_nn(x, params)
    out = jax.block_until_ready(out)
    assert out.shape == (batch, num_classes)

    # Pure-JAX f32 reference of the original layer-by-layer forward pass.
    ref = x
    for w, b in zip(weights, biases):
        ref = ref @ w + b
    np.testing.assert_allclose(
        np.asarray(out.astype(jnp.float32)), np.asarray(ref), atol=2e-2, rtol=2e-2)

    print("KERNEL_OK")
</pallas_src>

<mosaic_0001>
module attributes {stable_mosaic.version = 11 : i64} {
  func.func @_mlp_kernel(%arg0: i32, %arg1: memref<16x512xbf16, #tpu.memory_space<vmem>>, %arg2: memref<512x128xbf16, #tpu.memory_space<vmem>>, %arg3: memref<1x128xf32, #tpu.memory_space<vmem>>, %arg4: memref<16x128xbf16, #tpu.memory_space<vmem>>) attributes {dimension_semantics = [#tpu.dimension_semantics<parallel>], iteration_bounds = array<i64: 1>, scalar_prefetch = 0 : i64, scratch_operands = 0 : i64, tpu.core_type = #tpu.core_type<tc>, window_params = [{transform_indices = @transform_0, window_bounds = array<i64: 16, 512>}, {pipeline_mode = #tpu.pipeline_mode<synchronous>, transform_indices = @transform_1, window_bounds = array<i64: 512, 128>}, {pipeline_mode = #tpu.pipeline_mode<synchronous>, transform_indices = @transform_2, window_bounds = array<i64: 1, 128>}, {transform_indices = @transform_3, window_bounds = array<i64: 16, 128>}]} {
    %c0 = arith.constant 0 : index
    %c0_0 = arith.constant 0 : index
    %0 = vector.load %arg1[%c0, %c0_0] : memref<16x512xbf16, #tpu.memory_space<vmem>>, vector<16x512xbf16>
    %c0_1 = arith.constant 0 : index
    %c0_2 = arith.constant 0 : index
    %1 = vector.load %arg2[%c0_1, %c0_2] : memref<512x128xbf16, #tpu.memory_space<vmem>>, vector<512x128xbf16>
    %cst = arith.constant dense<0.000000e+00> : vector<16x128xf32>
    %2 = tpu.matmul %0, %1, %cst {dimension_numbers = #tpu.dot_dimension_numbers<[1], [0], [0], [1], [0, 0, 1, 1], [], []>} : vector<16x512xbf16>, vector<512x128xbf16>, vector<16x128xf32> -> vector<16x128xf32>
    %c0_3 = arith.constant 0 : index
    %c0_4 = arith.constant 0 : index
    %3 = vector.load %arg3[%c0_3, %c0_4] : memref<1x128xf32, #tpu.memory_space<vmem>>, vector<1x128xf32>
    %4 = vector.broadcast %3 : vector<1x128xf32> to vector<16x128xf32>
    %5 = arith.addf %2, %4 : vector<16x128xf32>
    %6 = arith.truncf %5 : vector<16x128xf32> to vector<16x128xbf16>
    %c0_5 = arith.constant 0 : index
    %c0_6 = arith.constant 0 : index
    %7 = vector.load %arg4[%c0_5, %c0_6] : memref<16x128xbf16, #tpu.memory_space<vmem>>, vector<16x128xbf16>
    tpu.vector_store %arg4[%c0_5, %c0_6], %6 {strides = array<i32>} : memref<16x128xbf16, #tpu.memory_space<vmem>>, vector<16x128xbf16>,
    return
  }
  func.func @transform_0(%arg0: i32) -> (i32, i32) {
    %c0_i32 = arith.constant 0 : i32
    %c0_i32_0 = arith.constant 0 : i32
    return %arg0, %c0_i32 : i32, i32
  }
  func.func @transform_1(%arg0: i32) -> (i32, i32) {
    %c0_i32 = arith.constant 0 : i32
    %c0_i32_0 = arith.constant 0 : i32
    %c0_i32_1 = arith.constant 0 : i32
    return %c0_i32, %c0_i32_0 : i32, i32
  }
  func.func @transform_2(%arg0: i32) -> (i32, i32) {
    %c0_i32 = arith.constant 0 : i32
    %c0_i32_0 = arith.constant 0 : i32
    %c0_i32_1 = arith.constant 0 : i32
    return %c0_i32, %c0_i32_0 : i32, i32
  }
  func.func @transform_3(%arg0: i32) -> (i32, i32) {
    %c0_i32 = arith.constant 0 : i32
    %c0_i32_0 = arith.constant 0 : i32
    return %arg0, %c0_i32 : i32, i32
  }
}

</mosaic_0001>

<llo_original>
// kernel: tpu_custom_call.1
$region0: #{tpu_custom_call.1}
  #allocation0 [shape = 'u32[]', space=smem, size = 0x4, offset = 0x4, fixed_abs, tag = 'smem constant byte address 0x4 - core index']
  #allocation1 [shape = 'u32[144,128]{1,0:T(1,128)}', space=vmem, size = 0x12000, scoped, tag = 'internal scratch']
  %s0 = inlined_call_operand.hbm [shape: bf16[16,512], index: 0, kind: input, shape index: {}]
  %s1 = inlined_call_operand.hbm [shape: bf16[512,128], index: 1, kind: input, shape index: {}]
  %s2 = inlined_call_operand.vmem [shape: f32[1,128], index: 2, kind: input, shape index: {}]
  %s3 = inlined_call_operand.hbm [shape: bf16[16,128], index: 3, kind: output, shape index: {}]
  %s4 = sld [smem:[#allocation0]]
  $region30: #{tpu_custom_call.1} parent=0
    _
  %s6 = ssub.s32 1, %s4
  %s7 = scalar_select 0, %s6, %s4
  $region1: #{tpu_custom_call.1} parent=0
    #allocation2 [shape = 'u8[16384]{0}', space=vmem, size = 0x4000, scoped, tag = 'input window, operand 0, single buffered']
    #allocation3 [shape = 's32[1]{0}', space=sflag, size = 0x4, scoped, tag = 'scoped memory for tpu_custom_call.1']
    #allocation4 [shape = 's32[1]{0}', space=sflag, size = 0x4, scoped, tag = 'scoped memory for tpu_custom_call.1']
    #allocation5 [shape = 'u8[131072]{0}', space=vmem, size = 0x20000, scoped, tag = 'input window, operand 1, single buffered']
    #allocation6 [shape = 's32[1]{0}', space=sflag, size = 0x4, scoped, tag = 'scoped memory for tpu_custom_call.1']
    #allocation7 [shape = 'u8[4096]{0}', space=vmem, size = 0x1000, scoped, tag = 'output window, operand 0, single buffered']
    %8 = vsyncpa [#allocation3], 0
    %9 = vsyncpa [#allocation6], 0
    %10 = vsyncpa [#allocation4], 0
    // Predicated region
    $region2: #{tpu_custom_call.1} parent=1 // pred_check
      _
    $region3: #{tpu_custom_call.1} parent=1 // pred_check_branch
      %12 = sbr.rel (0) target = $region5
    $region4: #{tpu_custom_call.1} parent=1 // pred_region
      %s14 = ssub.s32 512, 512
      %15 = vsyncadd [#allocation3], %s14
      %s16 = sshll.u32 [#allocation2], 4
      %s17 = int_to_ptr.vmem [resolvable:$true] %s16
      %22 = dma.hbm_to_vmem [thread:$0]  %s0, 512, %s17, [#allocation3], 256, 256, 16
    $region5: #{tpu_custom_call.1} parent=1 // pred_fallthru
      _
    // Predicated region
    $region6: #{tpu_custom_call.1} parent=1 // pred_check
      _
    $region7: #{tpu_custom_call.1} parent=1 // pred_check_branch
      %24 = sbr.rel (0) target = $region9
    $region8: #{tpu_custom_call.1} parent=1 // pred_region
      %s26 = ssub.s32 4096, 4096
      %27 = vsyncadd [#allocation6], %s26
      %s28 = sshll.u32 [#allocation5], 4
      %s29 = int_to_ptr.vmem [resolvable:$true] %s28
      %34 = dma.hbm_to_vmem [thread:$0]  %s1, 4096, %s29, [#allocation6], 64, 64, 4
    $region9: #{tpu_custom_call.1} parent=1 // pred_fallthru
      _
    // Predicated region
    $region10: #{tpu_custom_call.1} parent=1 // pred_check
      _
    $region11: #{tpu_custom_call.1} parent=1 // pred_check_branch
      %36 = sbr.rel (0) target = $region13
    $region12: #{tpu_custom_call.1} parent=1 // pred_region
      _
    $region13: #{tpu_custom_call.1} parent=1 // pred_fallthru
      _
    // Predicated region
    $region14: #{tpu_custom_call.1} parent=1 // pred_check
      _
    $region15: #{tpu_custom_call.1} parent=1 // pred_check_branch
      %38 = sbr.rel (0) target = $region17
    $region16: #{tpu_custom_call.1} parent=1 // pred_region
      %39 = dma.done [#allocation3], 512
    $region17: #{tpu_custom_call.1} parent=1 // pred_fallthru
      _
    // Predicated region
    $region18: #{tpu_custom_call.1} parent=1 // pred_check
      _
    $region19: #{tpu_custom_call.1} parent=1 // pred_check_branch
      %41 = sbr.rel (0) target = $region21
    $region20: #{tpu_custom_call.1} parent=1 // pred_region
      %42 = dma.done [#allocation6], 4096
    $region21: #{tpu_custom_call.1} parent=1 // pred_fallthru
      _
    %v44 = vld [vmem:[#allocation2] sm:$0xff]
    %v45 = vld [vmem:[#allocation2 + $0x8] sm:$0xff]
    %v46 = vld [vmem:[#allocation2 + $0x10] sm:$0xff]
    %v47 = vld [vmem:[#allocation2 + $0x18] sm:$0xff]
    %v48 = vld [vmem:[#allocation5] sm:$0xf]
    %v49 = vld [vmem:[#allocation5 + $0x4] sm:$0xf]
    %v50 = vld [vmem:[#allocation5 + $0x8] sm:$0xf]
    %v51 = vld [vmem:[#allocation5 + $0xc] sm:$0xf]
    %v52 = vld [vmem:[#allocation5 + $0x10] sm:$0xf]
    %v53 = vld [vmem:[#allocation5 + $0x14] sm:$0xf]
    %v54 = vld [vmem:[#allocation5 + $0x18] sm:$0xf]
    %v55 = vld [vmem:[#allocation5 + $0x1c] sm:$0xf]
    %v56 = vld [vmem:[#allocation5 + $0x20] sm:$0xf]
    %v57 = vld [vmem:[#allocation5 + $0x24] sm:$0xf]
    %v58 = vld [vmem:[#allocation5 + $0x28] sm:$0xf]
    %v59 = vld [vmem:[#allocation5 + $0x2c] sm:$0xf]
    %v60 = vld [vmem:[#allocation5 + $0x30] sm:$0xf]
    %v61 = vld [vmem:[#allocation5 + $0x34] sm:$0xf]
    %v62 = vld [vmem:[#allocation5 + $0x38] sm:$0xf]
    %v63 = vld [vmem:[#allocation5 + $0x3c] sm:$0xf]
    %v64 = vld [vmem:[#allocation5 + $0x40] sm:$0xf]
    %v65 = vld [vmem:[#allocation5 + $0x44] sm:$0xf]
    %v66 = vld [vmem:[#allocation5 + $0x48] sm:$0xf]
    %v67 = vld [vmem:[#allocation5 + $0x4c] sm:$0xf]
    %v68 = vld [vmem:[#allocation5 + $0x50] sm:$0xf]
    %v69 = vld [vmem:[#allocation5 + $0x54] sm:$0xf]
    %v70 = vld [vmem:[#allocation5 + $0x58] sm:$0xf]
    %v71 = vld [vmem:[#allocation5 + $0x5c] sm:$0xf]
    %v72 = vld [vmem:[#allocation5 + $0x60] sm:$0xf]
    %v73 = vld [vmem:[#allocation5 + $0x64] sm:$0xf]
    %v74 = vld [vmem:[#allocation5 + $0x68] sm:$0xf]
    %v75 = vld [vmem:[#allocation5 + $0x6c] sm:$0xf]
    %v76 = vld [vmem:[#allocation5 + $0x70] sm:$0xf]
    %v77 = vld [vmem:[#allocation5 + $0x74] sm:$0xf]
    %v78 = vld [vmem:[#allocation5 + $0x78] sm:$0xf]
    %v79 = vld [vmem:[#allocation5 + $0x7c] sm:$0xf]
    %v80 = vld [vmem:[#allocation5 + $0x80] sm:$0xf]
    %v81 = vld [vmem:[#allocation5 + $0x84] sm:$0xf]
    %v82 = vld [vmem:[#allocation5 + $0x88] sm:$0xf]
    %v83 = vld [vmem:[#allocation5 + $0x8c] sm:$0xf]
    %v84 = vld [vmem:[#allocation5 + $0x90] sm:$0xf]
    %v85 = vld [vmem:[#allocation5 + $0x94] sm:$0xf]
    %v86 = vld [vmem:[#allocation5 + $0x98] sm:$0xf]
    %v87 = vld [vmem:[#allocation5 + $0x9c] sm:$0xf]
    %v88 = vld [vmem:[#allocation5 + $0xa0] sm:$0xf]
    %v89 = vld [vmem:[#allocation5 + $0xa4] sm:$0xf]
    %v90 = vld [vmem:[#allocation5 + $0xa8] sm:$0xf]
    %v91 = vld [vmem:[#allocation5 + $0xac] sm:$0xf]
    %v92 = vld [vmem:[#allocation5 + $0xb0] sm:$0xf]
    %v93 = vld [vmem:[#allocation5 + $0xb4] sm:$0xf]
    %v94 = vld [vmem:[#allocation5 + $0xb8] sm:$0xf]
    %v95 = vld [vmem:[#allocation5 + $0xbc] sm:$0xf]
    %v96 = vld [vmem:[#allocation5 + $0xc0] sm:$0xf]
    %v97 = vld [vmem:[#allocation5 + $0xc4] sm:$0xf]
    %v98 = vld [vmem:[#allocation5 + $0xc8] sm:$0xf]
    %v99 = vld [vmem:[#allocation5 + $0xcc] sm:$0xf]
    %v100 = vld [vmem:[#allocation5 + $0xd0] sm:$0xf]
    %v101 = vld [vmem:[#allocation5 + $0xd4] sm:$0xf]
    %v102 = vld [vmem:[#allocation5 + $0xd8] sm:$0xf]
    %v103 = vld [vmem:[#allocation5 + $0xdc] sm:$0xf]
    %v104 = vld [vmem:[#allocation5 + $0xe0] sm:$0xf]
    %v105 = vld [vmem:[#allocation5 + $0xe4] sm:$0xf]
    %v106 = vld [vmem:[#allocation5 + $0xe8] sm:$0xf]
    %v107 = vld [vmem:[#allocation5 + $0xec] sm:$0xf]
    %v108 = vld [vmem:[#allocation5 + $0xf0] sm:$0xf]
    %v109 = vld [vmem:[#allocation5 + $0xf4] sm:$0xf]
    %v110 = vld [vmem:[#allocation5 + $0xf8] sm:$0xf]
    %v111 = vld [vmem:[#allocation5 + $0xfc] sm:$0xf]
    %v112 = vld [vmem:[%s2] sm:$0x1]
    %v114 = vlaneseq
    %v115 = vshrl.u32 %v114, 7
    %v116 = vsub.s32 0, %v115
    %v117 = vrot.slane %v112, %v116
    %v123 = vunpack.c.l.b16 %v44
    %v124 = vunpack.c.h.b16 %v44
    %v125 = vunpack.c.l.b16 %v45
    %v126 = vunpack.c.h.b16 %v45
    %v127 = vunpack.c.l.b16 %v46
    %v128 = vunpack.c.h.b16 %v46
    %v129 = vunpack.c.l.b16 %v47
    %v130 = vunpack.c.h.b16 %v47
    %v131 = vpack.c.b16 %v127, %v123
    %v132 = vpack.c.b16 %v128, %v124
    %v133 = vpack.c.b16 %v129, %v125
    %v134 = vpack.c.b16 %v130, %v126
    %v203 = vunpack.c.l.b16 %v48
    %v204 = vunpack.c.l.b16 %v49
    %v205 = vunpack.c.l.b16 %v50
    %v206 = vunpack.c.l.b16 %v51
    %v207 = vunpack.c.l.b16 %v52
    %v208 = vunpack.c.l.b16 %v53
    %v209 = vunpack.c.l.b16 %v54
    %v210 = vunpack.c.l.b16 %v55
    %v211 = vunpack.c.l.b16 %v56
    %v212 = vunpack.c.l.b16 %v57
    %v213 = vunpack.c.l.b16 %v58
    %v214 = vunpack.c.l.b16 %v59
    %v215 = vunpack.c.l.b16 %v60
    %v216 = vunpack.c.l.b16 %v61
    %v217 = vunpack.c.l.b16 %v62
    %v218 = vunpack.c.l.b16 %v63
    %v219 = vunpack.c.l.b16 %v64
    %v220 = vunpack.c.l.b16 %v65
    %v221 = vunpack.c.l.b16 %v66
    %v222 = vunpack.c.l.b16 %v67
    %v223 = vunpack.c.l.b16 %v68
    %v224 = vunpack.c.l.b16 %v69
    %v225 = vunpack.c.l.b16 %v70
    %v226 = vunpack.c.l.b16 %v71
    %v227 = vunpack.c.l.b16 %v72
    %v228 = vunpack.c.l.b16 %v73
    %v229 = vunpack.c.l.b16 %v74
    %v230 = vunpack.c.l.b16 %v75
    %v231 = vunpack.c.l.b16 %v76
    %v232 = vunpack.c.l.b16 %v77
    %v233 = vunpack.c.l.b16 %v78
    %v234 = vunpack.c.l.b16 %v79
    %v235 = vunpack.c.l.b16 %v80
    %v236 = vunpack.c.l.b16 %v81
    %v237 = vunpack.c.l.b16 %v82
    %v238 = vunpack.c.l.b16 %v83
    %v239 = vunpack.c.l.b16 %v84
    %v240 = vunpack.c.l.b16 %v85
    %v241 = vunpack.c.l.b16 %v86
    %v242 = vunpack.c.l.b16 %v87
    %v243 = vunpack.c.l.b16 %v88
    %v244 = vunpack.c.l.b16 %v89
    %v245 = vunpack.c.l.b16 %v90
    %v246 = vunpack.c.l.b16 %v91
    %v247 = vunpack.c.l.b16 %v92
    %v248 = vunpack.c.l.b16 %v93
    %v249 = vunpack.c.l.b16 %v94
    %v250 = vunpack.c.l.b16 %v95
    %v251 = vunpack.c.l.b16 %v96
    %v252 = vunpack.c.l.b16 %v97
    %v253 = vunpack.c.l.b16 %v98
    %v254 = vunpack.c.l.b16 %v99
    %v255 = vunpack.c.l.b16 %v100
    %v256 = vunpack.c.l.b16 %v101
    %v257 = vunpack.c.l.b16 %v102
    %v258 = vunpack.c.l.b16 %v103
    %v259 = vunpack.c.l.b16 %v104
    %v260 = vunpack.c.l.b16 %v105
    %v261 = vunpack.c.l.b16 %v106
    %v262 = vunpack.c.l.b16 %v107
    %v263 = vunpack.c.l.b16 %v108
    %v264 = vunpack.c.l.b16 %v109
    %v265 = vunpack.c.l.b16 %v110
    %v266 = vunpack.c.l.b16 %v111
    %v267 = vpack.c.b16 %v204, %v203
    %v268 = vpack.c.b16 %v206, %v205
    %v269 = vpack.c.b16 %v208, %v207
    %v270 = vpack.c.b16 %v210, %v209
    %v271 = vpack.c.b16 %v212, %v211
    %v272 = vpack.c.b16 %v214, %v213
    %v273 = vpack.c.b16 %v216, %v215
    %v274 = vpack.c.b16 %v218, %v217
    %v275 = vpack.c.b16 %v220, %v219
    %v276 = vpack.c.b16 %v222, %v221
    %v277 = vpack.c.b16 %v224, %v223
    %v278 = vpack.c.b16 %v226, %v225
    %v279 = vpack.c.b16 %v228, %v227
    %v280 = vpack.c.b16 %v230, %v229
    %v281 = vpack.c.b16 %v232, %v231
    %v282 = vpack.c.b16 %v234, %v233
    %v283 = vpack.c.b16 %v236, %v235
    %v284 = vpack.c.b16 %v238, %v237
    %v285 = vpack.c.b16 %v240, %v239
    %v286 = vpack.c.b16 %v242, %v241
    %v287 = vpack.c.b16 %v244, %v243
    %v288 = vpack.c.b16 %v246, %v245
    %v289 = vpack.c.b16 %v248, %v247
    %v290 = vpack.c.b16 %v250, %v249
    %v291 = vpack.c.b16 %v252, %v251
    %v292 = vpack.c.b16 %v254, %v253
    %v293 = vpack.c.b16 %v256, %v255
    %v294 = vpack.c.b16 %v258, %v257
    %v295 = vpack.c.b16 %v260, %v259
    %v296 = vpack.c.b16 %v262, %v261
    %v297 = vpack.c.b16 %v264, %v263
    %v298 = vpack.c.b16 %v266, %v265
    %331 = vmatprep.subr.bf16.mxu0 0
    %332 = vmatpush1.bf16.msra.mxu0 %v267
    %333 = vmatprep.subr.bf16.mxu0 0
    %334 = vmatpush1.bf16.msra.mxu0 %v268
    %335 = vmatprep.subr.bf16.mxu0 0
    %336 = vmatpush1.bf16.msra.mxu0 %v269
    %337 = vmatprep.subr.bf16.mxu0 0
    %338 = vmatpush1.bf16.msra.mxu0 %v270
    %339 = vmatprep.subr.bf16.mxu0 0
    %340 = vmatpush1.bf16.msra.mxu0 %v271
    %341 = vmatprep.subr.bf16.mxu0 0
    %342 = vmatpush1.bf16.msra.mxu0 %v272
    %343 = vmatprep.subr.bf16.mxu0 0
    %344 = vmatpush1.bf16.msra.mxu0 %v273
    %345 = vmatprep.subr.bf16.mxu0 0
    %346 = vmatpush1.bf16.msra.mxu0 %v274
    %347 = vmatprep.subr.bf16.mxu0 0
    %348 = vmatpush1.bf16.msra.mxu0 %v275
    %349 = vmatprep.subr.bf16.mxu0 0
    %350 = vmatpush1.bf16.msra.mxu0 %v276
    %351 = vmatprep.subr.bf16.mxu0 0
    %352 = vmatpush1.bf16.msra.mxu0 %v277
    %353 = vmatprep.subr.bf16.mxu0 0
    %354 = vmatpush1.bf16.msra.mxu0 %v278
    %355 = vmatprep.subr.bf16.mxu0 0
    %356 = vmatpush1.bf16.msra.mxu0 %v279
    %357 = vmatprep.subr.bf16.mxu0 0
    %358 = vmatpush1.bf16.msra.mxu0 %v280
    %359 = vmatprep.subr.bf16.mxu0 0
    %360 = vmatpush1.bf16.msra.mxu0 %v281
    %361 = vmatprep.subr.bf16.mxu0 0
    %362 = vmatpush1.bf16.msra.mxu0 %v282
    %363 = vmatprep.mubr.bf16.mxu0 %v132
    %364 = vmatmul.mubr.bf16.gmra.mrb[0].mxu0 %v131
    %v365 = vpop.f32.mrb[0].mxu0
    %v366 = vadd.f32 %v117, %v365
    %v367 = vpop.f32.mrb[0].mxu0
    %v368 = vpop.f32.mrb[0].mxu0
    %v369 = vadd.f32 %v117, %v368
    %v370 = vpop.f32.mrb[0].mxu0
    %371 = vdwg.mxu0
    %372 = vmatprep.subr.bf16.mxu0 0
    %373 = vmatpush1.bf16.msra.mxu0 %v283
    %374 = vmatprep.subr.bf16.mxu0 0
    %375 = vmatpush1.bf16.msra.mxu0 %v284
    %376 = vmatprep.subr.bf16.mxu0 0
    %377 = vmatpush1.bf16.msra.mxu0 %v285
    %378 = vmatprep.subr.bf16.mxu0 0
    %379 = vmatpush1.bf16.msra.mxu0 %v286
    %380 = vmatprep.subr.bf16.mxu0 0
    %381 = vmatpush1.bf16.msra.mxu0 %v287
    %382 = vmatprep.subr.bf16.mxu0 0
    %383 = vmatpush1.bf16.msra.mxu0 %v288
    %384 = vmatprep.subr.bf16.mxu0 0
    %385 = vmatpush1.bf16.msra.mxu0 %v289
    %386 = vmatprep.subr.bf16.mxu0 0
    %387 = vmatpush1.bf16.msra.mxu0 %v290
    %388 = vmatprep.subr.bf16.mxu0 0
    %389 = vmatpush1.bf16.msra.mxu0 %v291
    %390 = vmatprep.subr.bf16.mxu0 0
    %391 = vmatpush1.bf16.msra.mxu0 %v292
    %392 = vmatprep.subr.bf16.mxu0 0
    %393 = vmatpush1.bf16.msra.mxu0 %v293
    %394 = vmatprep.subr.bf16.mxu0 0
    %395 = vmatpush1.bf16.msra.mxu0 %v294
    %396 = vmatprep.subr.bf16.mxu0 0
    %397 = vmatpush1.bf16.msra.mxu0 %v295
    %398 = vmatprep.subr.bf16.mxu0 0
    %399 = vmatpush1.bf16.msra.mxu0 %v296
    %400 = vmatprep.subr.bf16.mxu0 0
    %401 = vmatpush1.bf16.msra.mxu0 %v297
    %402 = vmatprep.subr.bf16.mxu0 0
    %403 = vmatpush1.bf16.msra.mxu0 %v298
    %404 = vmatprep.mubr.bf16.mxu0 %v134
    %405 = vmatmul.mubr.bf16.gmra.mrb[0].mxu0 %v133
    %v406 = vpop.f32.mrb[0].mxu0
    %v407 = vadd.f32 %v366, %v406
    %v408 = vpop.f32.mrb[0].mxu0
    %v409 = vpop.f32.mrb[0].mxu0
    %v410 = vadd.f32 %v369, %v409
    %v411 = vpop.f32.mrb[0].mxu0
    %412 = vdwg.mxu0
    %v413 = vpack.c.bf16 %v410, %v407
    %v415 = vunpack.c.l.b16 %v413
    %v416 = vunpack.c.h.b16 %v413
    %v417 = vpack.c.b16 %v415, %v415
    %v418 = vpack.c.b16 %v416, %v416
    %421 = vst [vmem:[#allocation7] sm:$0xf] %v417
    %422 = vst [vmem:[#allocation7 + $0x4] sm:$0xf] %v418
    // Predicated region
    $region22: #{tpu_custom_call.1} parent=1 // pred_check
      _
    $region23: #{tpu_custom_call.1} parent=1 // pred_check_branch
      %424 = sbr.rel (0) target = $region25
    $region24: #{tpu_custom_call.1} parent=1 // pred_region
      %s426 = ssub.s32 128, 128
      %427 = vsyncadd [#allocation4], %s426
      %s428 = sshll.u32 [#allocation7], 4
      %s429 = int_to_ptr.vmem [resolvable:$true] %s428
      %434 = dma.vmem_to_hbm [thread:$0]  %s429, 128, %s3, [#allocation4], 64, 64, 4
    $region25: #{tpu_custom_call.1} parent=1 // pred_fallthru
      _
    // Predicated region
    $region26: #{tpu_custom_call.1} parent=1 // pred_check
      _
    $region27: #{tpu_custom_call.1} parent=1 // pred_check_branch
      %436 = sbr.rel (0) target = $region29
    $region28: #{tpu_custom_call.1} parent=1 // pred_region
      %437 = dma.done [#allocation4], 128
    $region29: #{tpu_custom_call.1} parent=1 // pred_fallthru
      _
    %438 = vsyncpa [#allocation3], 1
    %439 = vsyncpa [#allocation6], 1
    %440 = vsyncpa [#allocation4], 1

</llo_original>
